<compile_context>
chip_gen: v5e
topology: v5e:2x2
jax: 0.10.0
libtpu: 0.0.40
codegen_flags: <defaults>
</compile_context>

<pallas_src>
import functools

import jax
import jax.numpy as jnp
from jax.experimental import pallas as pl
from jax.experimental.pallas import tpu as pltpu


def _cdiv(a: int, b: int) -> int:
    return -(-a // b)


def _round_up(x: int, m: int) -> int:
    return _cdiv(x, m) * m


def _round_down(x: int, m: int) -> int:
    return (x // m) * m


def _maxpool1d_kernel(x_ref, o_ref, xt_ref, *, kernel_size: int, stride: int):
    """Max-pool one natural-layout row tile.

    x_ref : (tile_r, l_pad)   natural layout block; lanes >= L are DMA overhang.
    o_ref : (tile_r, n_win)   natural layout out block; lanes >= l_out masked on writeback.
    xt_ref: (l_pad, tile_r)   VMEM scratch: pooled axis on sublanes, rows lane-dense.
    """
    n_win = o_ref.shape[1]

    # Relayout once per tile in VMEM (XLU transpose, tile-aligned shapes) — this
    # replaces the previous wrapper-side HBM transpose.
    xt_ref[...] = x_ref[...].astype(xt_ref.dtype).T

    def window(k):
        # Rows k, k+stride, ..., k+(n_win-1)*stride  ->  (n_win, tile_r).
        if stride == 1:
            return xt_ref[pl.ds(k, n_win), :]
        return xt_ref[pl.ds(k, n_win, stride=stride), :]

    acc = window(0)
    for k in range(1, kernel_size):  # kernel_size is small -> cheap unroll (VPU only)
        acc = jnp.maximum(acc, window(k))

    # Back to natural layout; full lane-aligned store, Pallas masks the
    # (<=127) overhanging output columns on writeback.
    o_ref[...] = acc.T.astype(o_ref.dtype)


def max_pooler(logits: jax.Array, kernel_size: int, stride: int) -> jax.Array:
    """Equivalent of MaxPooler(kernel_size, stride)(logits) for (N, C, L) input."""
    n, c, l = logits.shape
    assert kernel_size >= 1 and stride >= 1
    l_out = (l - kernel_size) // stride + 1
    assert l_out >= 1, "kernel_size larger than sequence length"

    rows = n * c
    dtype = logits.dtype
    in_bytes = jnp.dtype(dtype).itemsize

    # Widen sub-32-bit dtypes for the in-kernel scratch / pooling (exact for max),
    # avoiding packed-sublane strided-read relayouts flagged in review.
    if in_bytes < 4:
        cdtype = jnp.float32 if jnp.issubdtype(dtype, jnp.floating) else jnp.int32
    else:
        cdtype = dtype

    # Output-block lane width (multiple of 128; overhang masked by Pallas) and
    # input-block lane width covering every window it implies, also rounded to
    # 128 so both in-kernel transposes are (8,128)-tile aligned.
    n_win = _round_up(l_out, 128)
    l_pad = _round_up(max(l, (n_win - 1) * stride + kernel_size), 128)

    # Row tile: multiple of 128 (lane-dense after the in-kernel transpose), sized
    # so the input block / scratch are ~2 MiB each: 2x input bufs + scratch +
    # output bufs + transpose temporaries stay well inside v5e's 16 MiB default
    # scoped VMEM and far below v7x's 64 MiB physical VMEM.
    target_block_bytes = 2 << 20
    tile_r = max(128, _round_down(target_block_bytes // (l_pad * max(in_bytes, 4)), 128))
    tile_r = min(tile_r, _round_up(rows, 128))
    # Keep >= 2 grid steps when there is enough work so ("parallel",) can shard
    # the row axis across both v7x TensorCores.
    if rows > 256 and _cdiv(rows, tile_r) < 2:
        tile_r = max(128, _round_up(_cdiv(rows, 2), 128))
    grid = (_cdiv(rows, tile_r),)
    # TODO(synk): for very long L (l_pad * 128 rows outgrowing the VMEM budget),
    # add a second "arbitrary" grid axis over L with halo-aware input blocks
    # instead of loading the full L per row block.

    x2d = logits.reshape(rows, l)  # free reshape: no extra HBM pass, no pad, no transpose

    kernel = functools.partial(
        _maxpool1d_kernel, kernel_size=kernel_size, stride=stride
    )

    out2d = pl.pallas_call(
        kernel,
        out_shape=jax.ShapeDtypeStruct((rows, l_out), dtype),
        grid=grid,
        in_specs=[pl.BlockSpec((tile_r, l_pad), lambda i: (i, 0))],
        out_specs=pl.BlockSpec((tile_r, n_win), lambda i: (i, 0)),
        scratch_shapes=[pltpu.VMEM((l_pad, tile_r), cdtype)],
        compiler_params=pltpu.CompilerParams(
            dimension_semantics=("parallel",),
            vmem_limit_bytes=32 * 1024 * 1024,  # safe on v5e/v6e/v7x; headroom over v5e's 16 MiB default
        ),
        cost_estimate=pl.CostEstimate(
            flops=rows * l_out * max(kernel_size - 1, 1),
            transcendentals=0,
            bytes_accessed=rows * (l + l_out) * in_bytes,
        ),
    )(x2d)

    return out2d.reshape(n, c, l_out)


def _reference_maxpool1d(logits, kernel_size, stride):
    n, c, l = logits.shape
    l_out = (l - kernel_size) // stride + 1
    cols = [
        jnp.max(logits[:, :, j * stride : j * stride + kernel_size], axis=-1)
        for j in range(l_out)
    ]
    return jnp.stack(cols, axis=-1)


if __name__ == "__main__":
    key = jax.random.PRNGKey(0)
    # Small shapes: batch=2, channels=4, seq_len=16; MaxPool1d(kernel_size=4, stride=2)
    N, C, L = 2, 4, 16
    kernel_size, stride = 4, 2

    logits = jax.random.normal(key, (N, C, L), dtype=jnp.float32)

    out = max_pooler(logits, kernel_size, stride)
    out = jax.block_until_ready(out)

    ref = _reference_maxpool1d(logits, kernel_size, stride)
    assert out.shape == ref.shape, (out.shape, ref.shape)
    assert jnp.allclose(out, ref), "mismatch vs reference"

    print("KERNEL_OK")
</pallas_src>

<mosaic_0001>
module attributes {stable_mosaic.version = 11 : i64} {
  func.func @_maxpool1d_kernel(%arg0: i32, %arg1: memref<128x384xf32, #tpu.memory_space<vmem>>, %arg2: memref<128x128xf32, #tpu.memory_space<vmem>>, %arg3: memref<384x128xf32, #tpu.memory_space<vmem>>) attributes {dimension_semantics = [#tpu.dimension_semantics<parallel>], iteration_bounds = array<i64: 1>, scalar_prefetch = 0 : i64, scratch_operands = 1 : i64, tpu.core_type = #tpu.core_type<tc>, window_params = [{transform_indices = @transform_0, window_bounds = array<i64: 128, 384>}, {transform_indices = @transform_1, window_bounds = array<i64: 128, 128>}]} {
    %c0 = arith.constant 0 : index
    %c0_0 = arith.constant 0 : index
    %0 = vector.load %arg1[%c0, %c0_0] : memref<128x384xf32, #tpu.memory_space<vmem>>, vector<128x384xf32>
    %1 = tpu.transpose %0, [1, 0] : vector<128x384xf32> -> vector<384x128xf32>
    %c0_1 = arith.constant 0 : index
    %c0_2 = arith.constant 0 : index
    %2 = vector.load %arg3[%c0_1, %c0_2] : memref<384x128xf32, #tpu.memory_space<vmem>>, vector<384x128xf32>
    tpu.vector_store %arg3[%c0_1, %c0_2], %1 {strides = array<i32>} : memref<384x128xf32, #tpu.memory_space<vmem>>, vector<384x128xf32>,
    %c0_3 = arith.constant 0 : index
    %c0_4 = arith.constant 0 : index
    %3 = tpu.strided_load %arg3[%c0_3, %c0_4] {strides = array<i32: 2, 1>} : memref<384x128xf32, #tpu.memory_space<vmem>>, vector<128x128xf32>
    %c1 = arith.constant 1 : index
    %c0_5 = arith.constant 0 : index
    %4 = tpu.strided_load %arg3[%c1, %c0_5] {strides = array<i32: 2, 1>} : memref<384x128xf32, #tpu.memory_space<vmem>>, vector<128x128xf32>
    %5 = arith.maximumf %3, %4 : vector<128x128xf32>
    %c2 = arith.constant 2 : index
    %c0_6 = arith.constant 0 : index
    %6 = tpu.strided_load %arg3[%c2, %c0_6] {strides = array<i32: 2, 1>} : memref<384x128xf32, #tpu.memory_space<vmem>>, vector<128x128xf32>
    %7 = arith.maximumf %5, %6 : vector<128x128xf32>
    %c3 = arith.constant 3 : index
    %c0_7 = arith.constant 0 : index
    %8 = tpu.strided_load %arg3[%c3, %c0_7] {strides = array<i32: 2, 1>} : memref<384x128xf32, #tpu.memory_space<vmem>>, vector<128x128xf32>
    %9 = arith.maximumf %7, %8 : vector<128x128xf32>
    %10 = tpu.transpose %9, [1, 0] : vector<128x128xf32> -> vector<128x128xf32>
    %c0_8 = arith.constant 0 : index
    %c0_9 = arith.constant 0 : index
    %11 = vector.load %arg2[%c0_8, %c0_9] : memref<128x128xf32, #tpu.memory_space<vmem>>, vector<128x128xf32>
    tpu.vector_store %arg2[%c0_8, %c0_9], %10 {strides = array<i32>} : memref<128x128xf32, #tpu.memory_space<vmem>>, vector<128x128xf32>,
    return
  }
  func.func @transform_0(%arg0: i32) -> (i32, i32) {
    %c0_i32 = arith.constant 0 : i32
    %c0_i32_0 = arith.constant 0 : i32
    return %arg0, %c0_i32 : i32, i32
  }
  func.func @transform_1(%arg0: i32) -> (i32, i32) {
    %c0_i32 = arith.constant 0 : i32
    %c0_i32_0 = arith.constant 0 : i32
    return %arg0, %c0_i32 : i32, i32
  }
}

</mosaic_0001>

<llo_original>
// kernel: tpu_custom_call.1
$region0: #{tpu_custom_call.1}
  #allocation0 [shape = 'u32[]', space=smem, size = 0x4, offset = 0x4, fixed_abs, tag = 'smem constant byte address 0x4 - core index']
  #allocation1 [shape = 'u32[72,128]{1,0:T(1,128)}', space=vmem, size = 0x9000, scoped, tag = 'internal scratch']
  #allocation2 [shape = 'f32[384,128]{1,0:T(8,128)}', space=vmem, size = 0x30000, scoped, tag = 'scratch operand']
  %s0 = inlined_call_operand.hbm [shape: f32[8,16], index: 0, kind: input, shape index: {}]
  %s1 = inlined_call_operand.hbm [shape: f32[8,7], index: 1, kind: output, shape index: {}]
  %s2 = sld [smem:[#allocation0]]
  $region18: #{tpu_custom_call.1} parent=0
    _
  %s4 = ssub.s32 1, %s2
  %s5 = scalar_select 0, %s4, %s2
  $region1: #{tpu_custom_call.1} parent=0
    #allocation3 [shape = 'u8[196608]{0}', space=vmem, size = 0x30000, scoped, tag = 'input window, operand 0, single buffered']
    #allocation4 [shape = 's32[1]{0}', space=sflag, size = 0x4, scoped, tag = 'scoped memory for tpu_custom_call.1']
    #allocation5 [shape = 's32[1]{0}', space=sflag, size = 0x4, scoped, tag = 'scoped memory for tpu_custom_call.1']
    #allocation6 [shape = 'u8[65536]{0}', space=vmem, size = 0x10000, scoped, tag = 'output window, operand 0, single buffered']
    %6 = vsyncpa [#allocation4], 0
    %7 = vsyncpa [#allocation5], 0
    // Predicated region
    $region2: #{tpu_custom_call.1} parent=1 // pred_check
      _
    $region3: #{tpu_custom_call.1} parent=1 // pred_check_branch
      %9 = sbr.rel (0) target = $region5
    $region4: #{tpu_custom_call.1} parent=1 // pred_region
      %11 = vsyncadd [#allocation4], 6016
      %s12 = sshll.u32 %s0, 4
      %s13 = int_to_ptr.hbm [resolvable:$true] %s12
      %s14 = sshll.u32 [#allocation3], 4
      %s15 = int_to_ptr.vmem [resolvable:$true] %s14
      %20 = dma.hbm_to_vmem [thread:$0]  %s13, 128, %s15, [#allocation4], 128, 384, 8
    $region5: #{tpu_custom_call.1} parent=1 // pred_fallthru
      _
    // Predicated region
    $region6: #{tpu_custom_call.1} parent=1 // pred_check
      _
    $region7: #{tpu_custom_call.1} parent=1 // pred_check_branch
      %22 = sbr.rel (0) target = $region9
    $region8: #{tpu_custom_call.1} parent=1 // pred_region
      %24 = dma.done [#allocation4], 6144
    $region9: #{tpu_custom_call.1} parent=1 // pred_fallthru
      _
    %v25 = vld [vmem:[#allocation3] sm:$0xff]
    %v26 = vld [vmem:[#allocation3 + $0x8] sm:$0xff]
    %v27 = vld [vmem:[#allocation3 + $0x10] sm:$0xff]
    %v28 = vld [vmem:[#allocation3 + $0x18] sm:$0xff]
    %v29 = vld [vmem:[#allocation3 + $0x20] sm:$0xff]
    %v30 = vld [vmem:[#allocation3 + $0x28] sm:$0xff]
    %v31 = vld [vmem:[#allocation3 + $0x30] sm:$0xff]
    %v32 = vld [vmem:[#allocation3 + $0x38] sm:$0xff]
    %v33 = vld [vmem:[#allocation3 + $0x40] sm:$0xff]
    %v34 = vld [vmem:[#allocation3 + $0x48] sm:$0xff]
    %v35 = vld [vmem:[#allocation3 + $0x50] sm:$0xff]
    %v36 = vld [vmem:[#allocation3 + $0x58] sm:$0xff]
    %v37 = vld [vmem:[#allocation3 + $0x60] sm:$0xff]
    %v38 = vld [vmem:[#allocation3 + $0x68] sm:$0xff]
    %v39 = vld [vmem:[#allocation3 + $0x70] sm:$0xff]
    %v40 = vld [vmem:[#allocation3 + $0x78] sm:$0xff]
    %v41 = vld [vmem:[#allocation3 + $0x80] sm:$0xff]
    %v42 = vld [vmem:[#allocation3 + $0x88] sm:$0xff]
    %v43 = vld [vmem:[#allocation3 + $0x90] sm:$0xff]
    %v44 = vld [vmem:[#allocation3 + $0x98] sm:$0xff]
    %v45 = vld [vmem:[#allocation3 + $0xa0] sm:$0xff]
    %v46 = vld [vmem:[#allocation3 + $0xa8] sm:$0xff]
    %v47 = vld [vmem:[#allocation3 + $0xb0] sm:$0xff]
    %v48 = vld [vmem:[#allocation3 + $0xb8] sm:$0xff]
    %v49 = vld [vmem:[#allocation3 + $0xc0] sm:$0xff]
    %v50 = vld [vmem:[#allocation3 + $0xc8] sm:$0xff]
    %v51 = vld [vmem:[#allocation3 + $0xd0] sm:$0xff]
    %v52 = vld [vmem:[#allocation3 + $0xd8] sm:$0xff]
    %v53 = vld [vmem:[#allocation3 + $0xe0] sm:$0xff]
    %v54 = vld [vmem:[#allocation3 + $0xe8] sm:$0xff]
    %v55 = vld [vmem:[#allocation3 + $0xf0] sm:$0xff]
    %v56 = vld [vmem:[#allocation3 + $0xf8] sm:$0xff]
    %v57 = vld [vmem:[#allocation3 + $0x100] sm:$0xff]
    %v58 = vld [vmem:[#allocation3 + $0x108] sm:$0xff]
    %v59 = vld [vmem:[#allocation3 + $0x110] sm:$0xff]
    %v60 = vld [vmem:[#allocation3 + $0x118] sm:$0xff]
    %v61 = vld [vmem:[#allocation3 + $0x120] sm:$0xff]
    %v62 = vld [vmem:[#allocation3 + $0x128] sm:$0xff]
    %v63 = vld [vmem:[#allocation3 + $0x130] sm:$0xff]
    %v64 = vld [vmem:[#allocation3 + $0x138] sm:$0xff]
    %v65 = vld [vmem:[#allocation3 + $0x140] sm:$0xff]
    %v66 = vld [vmem:[#allocation3 + $0x148] sm:$0xff]
    %v67 = vld [vmem:[#allocation3 + $0x150] sm:$0xff]
    %v68 = vld [vmem:[#allocation3 + $0x158] sm:$0xff]
    %v69 = vld [vmem:[#allocation3 + $0x160] sm:$0xff]
    %v70 = vld [vmem:[#allocation3 + $0x168] sm:$0xff]
    %v71 = vld [vmem:[#allocation3 + $0x170] sm:$0xff]
    %v72 = vld [vmem:[#allocation3 + $0x178] sm:$0xff]
    %73 = vxpose.xlu0.b32.start [1/16] %v25, 128
    %74 = vxpose.xlu0.b32.cont [2/16] %v28, 128
    %75 = vxpose.xlu0.b32.cont [3/16] %v31, 128
    %76 = vxpose.xlu0.b32.cont [4/16] %v34, 128
    %77 = vxpose.xlu0.b32.cont [5/16] %v37, 128
    %78 = vxpose.xlu0.b32.cont [6/16] %v40, 128
    %79 = vxpose.xlu0.b32.cont [7/16] %v43, 128
    %80 = vxpose.xlu0.b32.cont [8/16] %v46, 128
    %81 = vxpose.xlu0.b32.cont [9/16] %v49, 128
    %82 = vxpose.xlu0.b32.cont [10/16] %v52, 128
    %83 = vxpose.xlu0.b32.cont [11/16] %v55, 128
    %84 = vxpose.xlu0.b32.cont [12/16] %v58, 128
    %85 = vxpose.xlu0.b32.cont [13/16] %v61, 128
    %86 = vxpose.xlu0.b32.cont [14/16] %v64, 128
    %87 = vxpose.xlu0.b32.cont [15/16] %v67, 128
    %88 = vxpose.xlu0.b32.end [16/16] %v70, 128
    %v89 = vpop.trf.xlu0
    %v90 = vpop.trf.xlu0
    %v91 = vpop.trf.xlu0
    %v92 = vpop.trf.xlu0
    %v93 = vpop.trf.xlu0
    %v94 = vpop.trf.xlu0
    %v95 = vpop.trf.xlu0
    %v96 = vpop.trf.xlu0
    %v97 = vpop.trf.xlu0
    %v98 = vpop.trf.xlu0
    %v99 = vpop.trf.xlu0
    %v100 = vpop.trf.xlu0
    %v101 = vpop.trf.xlu0
    %v102 = vpop.trf.xlu0
    %v103 = vpop.trf.xlu0
    %v104 = vpop.trf.xlu0
    %105 = vxpose.xlu0.b32.start [1/16] %v26, 128
    %106 = vxpose.xlu0.b32.cont [2/16] %v29, 128
    %107 = vxpose.xlu0.b32.cont [3/16] %v32, 128
    %108 = vxpose.xlu0.b32.cont [4/16] %v35, 128
    %109 = vxpose.xlu0.b32.cont [5/16] %v38, 128
    %110 = vxpose.xlu0.b32.cont [6/16] %v41, 128
    %111 = vxpose.xlu0.b32.cont [7/16] %v44, 128
    %112 = vxpose.xlu0.b32.cont [8/16] %v47, 128
    %113 = vxpose.xlu0.b32.cont [9/16] %v50, 128
    %114 = vxpose.xlu0.b32.cont [10/16] %v53, 128
    %115 = vxpose.xlu0.b32.cont [11/16] %v56, 128
    %116 = vxpose.xlu0.b32.cont [12/16] %v59, 128
    %117 = vxpose.xlu0.b32.cont [13/16] %v62, 128
    %118 = vxpose.xlu0.b32.cont [14/16] %v65, 128
    %119 = vxpose.xlu0.b32.cont [15/16] %v68, 128
    %120 = vxpose.xlu0.b32.end [16/16] %v71, 128
    %v121 = vpop.trf.xlu0
    %v122 = vpop.trf.xlu0
    %v123 = vpop.trf.xlu0
    %v124 = vpop.trf.xlu0
    %v125 = vpop.trf.xlu0
    %v126 = vpop.trf.xlu0
    %v127 = vpop.trf.xlu0
    %v128 = vpop.trf.xlu0
    %v129 = vpop.trf.xlu0
    %v130 = vpop.trf.xlu0
    %v131 = vpop.trf.xlu0
    %v132 = vpop.trf.xlu0
    %v133 = vpop.trf.xlu0
    %v134 = vpop.trf.xlu0
    %v135 = vpop.trf.xlu0
    %v136 = vpop.trf.xlu0
    %137 = vxpose.xlu0.b32.start [1/16] %v27, 128
    %138 = vxpose.xlu0.b32.cont [2/16] %v30, 128
    %139 = vxpose.xlu0.b32.cont [3/16] %v33, 128
    %140 = vxpose.xlu0.b32.cont [4/16] %v36, 128
    %141 = vxpose.xlu0.b32.cont [5/16] %v39, 128
    %142 = vxpose.xlu0.b32.cont [6/16] %v42, 128
    %143 = vxpose.xlu0.b32.cont [7/16] %v45, 128
    %144 = vxpose.xlu0.b32.cont [8/16] %v48, 128
    %145 = vxpose.xlu0.b32.cont [9/16] %v51, 128
    %146 = vxpose.xlu0.b32.cont [10/16] %v54, 128
    %147 = vxpose.xlu0.b32.cont [11/16] %v57, 128
    %148 = vxpose.xlu0.b32.cont [12/16] %v60, 128
    %149 = vxpose.xlu0.b32.cont [13/16] %v63, 128
    %150 = vxpose.xlu0.b32.cont [14/16] %v66, 128
    %151 = vxpose.xlu0.b32.cont [15/16] %v69, 128
    %152 = vxpose.xlu0.b32.end [16/16] %v72, 128
    %v153 = vpop.trf.xlu0
    %v154 = vpop.trf.xlu0
    %v155 = vpop.trf.xlu0
    %v156 = vpop.trf.xlu0
    %v157 = vpop.trf.xlu0
    %v158 = vpop.trf.xlu0
    %v159 = vpop.trf.xlu0
    %v160 = vpop.trf.xlu0
    %v161 = vpop.trf.xlu0
    %v162 = vpop.trf.xlu0
    %v163 = vpop.trf.xlu0
    %v164 = vpop.trf.xlu0
    %v165 = vpop.trf.xlu0
    %v166 = vpop.trf.xlu0
    %v167 = vpop.trf.xlu0
    %v168 = vpop.trf.xlu0
    %169 = vst [vmem:[#allocation2] sm:$0xff] %v89
    %170 = vst [vmem:[#allocation2 + $0x8] sm:$0xff] %v90
    %171 = vst [vmem:[#allocation2 + $0x10] sm:$0xff] %v91
    %172 = vst [vmem:[#allocation2 + $0x18] sm:$0xff] %v92
    %173 = vst [vmem:[#allocation2 + $0x20] sm:$0xff] %v93
    %174 = vst [vmem:[#allocation2 + $0x28] sm:$0xff] %v94
    %175 = vst [vmem:[#allocation2 + $0x30] sm:$0xff] %v95
    %176 = vst [vmem:[#allocation2 + $0x38] sm:$0xff] %v96
    %177 = vst [vmem:[#allocation2 + $0x40] sm:$0xff] %v97
    %178 = vst [vmem:[#allocation2 + $0x48] sm:$0xff] %v98
    %179 = vst [vmem:[#allocation2 + $0x50] sm:$0xff] %v99
    %180 = vst [vmem:[#allocation2 + $0x58] sm:$0xff] %v100
    %181 = vst [vmem:[#allocation2 + $0x60] sm:$0xff] %v101
    %182 = vst [vmem:[#allocation2 + $0x68] sm:$0xff] %v102
    %183 = vst [vmem:[#allocation2 + $0x70] sm:$0xff] %v103
    %184 = vst [vmem:[#allocation2 + $0x78] sm:$0xff] %v104
    %185 = vst [vmem:[#allocation2 + $0x80] sm:$0xff] %v121
    %186 = vst [vmem:[#allocation2 + $0x88] sm:$0xff] %v122
    %187 = vst [vmem:[#allocation2 + $0x90] sm:$0xff] %v123
    %188 = vst [vmem:[#allocation2 + $0x98] sm:$0xff] %v124
    %189 = vst [vmem:[#allocation2 + $0xa0] sm:$0xff] %v125
    %190 = vst [vmem:[#allocation2 + $0xa8] sm:$0xff] %v126
    %191 = vst [vmem:[#allocation2 + $0xb0] sm:$0xff] %v127
    %192 = vst [vmem:[#allocation2 + $0xb8] sm:$0xff] %v128
    %193 = vst [vmem:[#allocation2 + $0xc0] sm:$0xff] %v129
    %194 = vst [vmem:[#allocation2 + $0xc8] sm:$0xff] %v130
    %195 = vst [vmem:[#allocation2 + $0xd0] sm:$0xff] %v131
    %196 = vst [vmem:[#allocation2 + $0xd8] sm:$0xff] %v132
    %197 = vst [vmem:[#allocation2 + $0xe0] sm:$0xff] %v133
    %198 = vst [vmem:[#allocation2 + $0xe8] sm:$0xff] %v134
    %199 = vst [vmem:[#allocation2 + $0xf0] sm:$0xff] %v135
    %200 = vst [vmem:[#allocation2 + $0xf8] sm:$0xff] %v136
    %201 = vst [vmem:[#allocation2 + $0x100] sm:$0xff] %v153
    %202 = vst [vmem:[#allocation2 + $0x108] sm:$0xff] %v154
    %203 = vst [vmem:[#allocation2 + $0x110] sm:$0xff] %v155
    %204 = vst [vmem:[#allocation2 + $0x118] sm:$0xff] %v156
    %205 = vst [vmem:[#allocation2 + $0x120] sm:$0xff] %v157
    %206 = vst [vmem:[#allocation2 + $0x128] sm:$0xff] %v158
    %207 = vst [vmem:[#allocation2 + $0x130] sm:$0xff] %v159
    %208 = vst [vmem:[#allocation2 + $0x138] sm:$0xff] %v160
    %209 = vst [vmem:[#allocation2 + $0x140] sm:$0xff] %v161
    %210 = vst [vmem:[#allocation2 + $0x148] sm:$0xff] %v162
    %211 = vst [vmem:[#allocation2 + $0x150] sm:$0xff] %v163
    %212 = vst [vmem:[#allocation2 + $0x158] sm:$0xff] %v164
    %213 = vst [vmem:[#allocation2 + $0x160] sm:$0xff] %v165
    %214 = vst [vmem:[#allocation2 + $0x168] sm:$0xff] %v166
    %215 = vst [vmem:[#allocation2 + $0x170] sm:$0xff] %v167
    %216 = vst [vmem:[#allocation2 + $0x178] sm:$0xff] %v168
    %v217 = vld [vmem:[#allocation2] ss:$2 sm:$0xff]
    %s218 = scalar_lea.vmem [#allocation2], 16
    %v219 = vld [vmem:[%s218] ss:$2 sm:$0xff]
    %s220 = scalar_lea.vmem [#allocation2], 32
    %v221 = vld [vmem:[%s220] ss:$2 sm:$0xff]
    %s222 = scalar_lea.vmem [#allocation2], 48
    %v223 = vld [vmem:[%s222] ss:$2 sm:$0xff]
    %s224 = scalar_lea.vmem [#allocation2], 64
    %v225 = vld [vmem:[%s224] ss:$2 sm:$0xff]
    %s226 = scalar_lea.vmem [#allocation2], 80
    %v227 = vld [vmem:[%s226] ss:$2 sm:$0xff]
    %s228 = scalar_lea.vmem [#allocation2], 96
    %v229 = vld [vmem:[%s228] ss:$2 sm:$0xff]
    %s230 = scalar_lea.vmem [#allocation2], 112
    %v231 = vld [vmem:[%s230] ss:$2 sm:$0xff]
    %s232 = scalar_lea.vmem [#allocation2], 128
    %v233 = vld [vmem:[%s232] ss:$2 sm:$0xff]
    %s234 = scalar_lea.vmem [#allocation2], 144
    %v235 = vld [vmem:[%s234] ss:$2 sm:$0xff]
    %s236 = scalar_lea.vmem [#allocation2], 160
    %v237 = vld [vmem:[%s236] ss:$2 sm:$0xff]
    %s238 = scalar_lea.vmem [#allocation2], 176
    %v239 = vld [vmem:[%s238] ss:$2 sm:$0xff]
    %s240 = scalar_lea.vmem [#allocation2], 192
    %v241 = vld [vmem:[%s240] ss:$2 sm:$0xff]
    %s242 = scalar_lea.vmem [#allocation2], 208
    %v243 = vld [vmem:[%s242] ss:$2 sm:$0xff]
    %s244 = scalar_lea.vmem [#allocation2], 224
    %v245 = vld [vmem:[%s244] ss:$2 sm:$0xff]
    %s246 = scalar_lea.vmem [#allocation2], 240
    %v247 = vld [vmem:[%s246] ss:$2 sm:$0xff]
    %s248 = scalar_lea.vmem [#allocation2], 1
    %v249 = vld [vmem:[%s248] ss:$2 sm:$0xff]
    %s250 = scalar_lea.vmem [#allocation2], 17
    %v251 = vld [vmem:[%s250] ss:$2 sm:$0xff]
    %s252 = scalar_lea.vmem [#allocation2], 33
    %v253 = vld [vmem:[%s252] ss:$2 sm:$0xff]
    %s254 = scalar_lea.vmem [#allocation2], 49
    %v255 = vld [vmem:[%s254] ss:$2 sm:$0xff]
    %s256 = scalar_lea.vmem [#allocation2], 65
    %v257 = vld [vmem:[%s256] ss:$2 sm:$0xff]
    %s258 = scalar_lea.vmem [#allocation2], 81
    %v259 = vld [vmem:[%s258] ss:$2 sm:$0xff]
    %s260 = scalar_lea.vmem [#allocation2], 97
    %v261 = vld [vmem:[%s260] ss:$2 sm:$0xff]
    %s262 = scalar_lea.vmem [#allocation2], 113
    %v263 = vld [vmem:[%s262] ss:$2 sm:$0xff]
    %s264 = scalar_lea.vmem [#allocation2], 129
    %v265 = vld [vmem:[%s264] ss:$2 sm:$0xff]
    %s266 = scalar_lea.vmem [#allocation2], 145
    %v267 = vld [vmem:[%s266] ss:$2 sm:$0xff]
    %s268 = scalar_lea.vmem [#allocation2], 161
    %v269 = vld [vmem:[%s268] ss:$2 sm:$0xff]
    %s270 = scalar_lea.vmem [#allocation2], 177
    %v271 = vld [vmem:[%s270] ss:$2 sm:$0xff]
    %s272 = scalar_lea.vmem [#allocation2], 193
    %v273 = vld [vmem:[%s272] ss:$2 sm:$0xff]
    %s274 = scalar_lea.vmem [#allocation2], 209
    %v275 = vld [vmem:[%s274] ss:$2 sm:$0xff]
    %s276 = scalar_lea.vmem [#allocation2], 225
    %v277 = vld [vmem:[%s276] ss:$2 sm:$0xff]
    %s278 = scalar_lea.vmem [#allocation2], 241
    %v279 = vld [vmem:[%s278] ss:$2 sm:$0xff]
    %v280 = vmax.f32 %v217, %v249
    %v281 = vmax.f32 %v219, %v251
    %v282 = vmax.f32 %v221, %v253
    %v283 = vmax.f32 %v223, %v255
    %v284 = vmax.f32 %v225, %v257
    %v285 = vmax.f32 %v227, %v259
    %v286 = vmax.f32 %v229, %v261
    %v287 = vmax.f32 %v231, %v263
    %v288 = vmax.f32 %v233, %v265
    %v289 = vmax.f32 %v235, %v267
    %v290 = vmax.f32 %v237, %v269
    %v291 = vmax.f32 %v239, %v271
    %v292 = vmax.f32 %v241, %v273
    %v293 = vmax.f32 %v243, %v275
    %v294 = vmax.f32 %v245, %v277
    %v295 = vmax.f32 %v247, %v279
    %s296 = scalar_lea.vmem [#allocation2], 2
    %v297 = vld [vmem:[%s296] ss:$2 sm:$0xff]
    %s298 = scalar_lea.vmem [#allocation2], 18
    %v299 = vld [vmem:[%s298] ss:$2 sm:$0xff]
    %s300 = scalar_lea.vmem [#allocation2], 34
    %v301 = vld [vmem:[%s300] ss:$2 sm:$0xff]
    %s302 = scalar_lea.vmem [#allocation2], 50
    %v303 = vld [vmem:[%s302] ss:$2 sm:$0xff]
    %s304 = scalar_lea.vmem [#allocation2], 66
    %v305 = vld [vmem:[%s304] ss:$2 sm:$0xff]
    %s306 = scalar_lea.vmem [#allocation2], 82
    %v307 = vld [vmem:[%s306] ss:$2 sm:$0xff]
    %s308 = scalar_lea.vmem [#allocation2], 98
    %v309 = vld [vmem:[%s308] ss:$2 sm:$0xff]
    %s310 = scalar_lea.vmem [#allocation2], 114
    %v311 = vld [vmem:[%s310] ss:$2 sm:$0xff]
    %s312 = scalar_lea.vmem [#allocation2], 130
    %v313 = vld [vmem:[%s312] ss:$2 sm:$0xff]
    %s314 = scalar_lea.vmem [#allocation2], 146
    %v315 = vld [vmem:[%s314] ss:$2 sm:$0xff]
    %s316 = scalar_lea.vmem [#allocation2], 162
    %v317 = vld [vmem:[%s316] ss:$2 sm:$0xff]
    %s318 = scalar_lea.vmem [#allocation2], 178
    %v319 = vld [vmem:[%s318] ss:$2 sm:$0xff]
    %s320 = scalar_lea.vmem [#allocation2], 194
    %v321 = vld [vmem:[%s320] ss:$2 sm:$0xff]
    %s322 = scalar_lea.vmem [#allocation2], 210
    %v323 = vld [vmem:[%s322] ss:$2 sm:$0xff]
    %s324 = scalar_lea.vmem [#allocation2], 226
    %v325 = vld [vmem:[%s324] ss:$2 sm:$0xff]
    %s326 = scalar_lea.vmem [#allocation2], 242
    %v327 = vld [vmem:[%s326] ss:$2 sm:$0xff]
    %v328 = vmax.f32 %v280, %v297
    %v329 = vmax.f32 %v281, %v299
    %v330 = vmax.f32 %v282, %v301
    %v331 = vmax.f32 %v283, %v303
    %v332 = vmax.f32 %v284, %v305
    %v333 = vmax.f32 %v285, %v307
    %v334 = vmax.f32 %v286, %v309
    %v335 = vmax.f32 %v287, %v311
    %v336 = vmax.f32 %v288, %v313
    %v337 = vmax.f32 %v289, %v315
    %v338 = vmax.f32 %v290, %v317
    %v339 = vmax.f32 %v291, %v319
    %v340 = vmax.f32 %v292, %v321
    %v341 = vmax.f32 %v293, %v323
    %v342 = vmax.f32 %v294, %v325
    %v343 = vmax.f32 %v295, %v327
    %s344 = scalar_lea.vmem [#allocation2], 3
    %v345 = vld [vmem:[%s344] ss:$2 sm:$0xff]
    %s346 = scalar_lea.vmem [#allocation2], 19
    %v347 = vld [vmem:[%s346] ss:$2 sm:$0xff]
    %s348 = scalar_lea.vmem [#allocation2], 35
    %v349 = vld [vmem:[%s348] ss:$2 sm:$0xff]
    %s350 = scalar_lea.vmem [#allocation2], 51
    %v351 = vld [vmem:[%s350] ss:$2 sm:$0xff]
    %s352 = scalar_lea.vmem [#allocation2], 67
    %v353 = vld [vmem:[%s352] ss:$2 sm:$0xff]
    %s354 = scalar_lea.vmem [#allocation2], 83
    %v355 = vld [vmem:[%s354] ss:$2 sm:$0xff]
    %s356 = scalar_lea.vmem [#allocation2], 99
    %v357 = vld [vmem:[%s356] ss:$2 sm:$0xff]
    %s358 = scalar_lea.vmem [#allocation2], 115
    %v359 = vld [vmem:[%s358] ss:$2 sm:$0xff]
    %s360 = scalar_lea.vmem [#allocation2], 131
    %v361 = vld [vmem:[%s360] ss:$2 sm:$0xff]
    %s362 = scalar_lea.vmem [#allocation2], 147
    %v363 = vld [vmem:[%s362] ss:$2 sm:$0xff]
    %s364 = scalar_lea.vmem [#allocation2], 163
    %v365 = vld [vmem:[%s364] ss:$2 sm:$0xff]
    %s366 = scalar_lea.vmem [#allocation2], 179
    %v367 = vld [vmem:[%s366] ss:$2 sm:$0xff]
    %s368 = scalar_lea.vmem [#allocation2], 195
    %v369 = vld [vmem:[%s368] ss:$2 sm:$0xff]
    %s370 = scalar_lea.vmem [#allocation2], 211
    %v371 = vld [vmem:[%s370] ss:$2 sm:$0xff]
    %s372 = scalar_lea.vmem [#allocation2], 227
    %v373 = vld [vmem:[%s372] ss:$2 sm:$0xff]
    %s374 = scalar_lea.vmem [#allocation2], 243
    %v375 = vld [vmem:[%s374] ss:$2 sm:$0xff]
    %v376 = vmax.f32 %v328, %v345
    %v377 = vmax.f32 %v329, %v347
    %v378 = vmax.f32 %v330, %v349
    %v379 = vmax.f32 %v331, %v351
    %v380 = vmax.f32 %v332, %v353
    %v381 = vmax.f32 %v333, %v355
    %v382 = vmax.f32 %v334, %v357
    %v383 = vmax.f32 %v335, %v359
    %v384 = vmax.f32 %v336, %v361
    %v385 = vmax.f32 %v337, %v363
    %v386 = vmax.f32 %v338, %v365
    %v387 = vmax.f32 %v339, %v367
    %v388 = vmax.f32 %v340, %v369
    %v389 = vmax.f32 %v341, %v371
    %v390 = vmax.f32 %v342, %v373
    %v391 = vmax.f32 %v343, %v375
    %392 = vxpose.xlu0.b32.start [1/16] %v376, 128
    %393 = vxpose.xlu0.b32.cont [2/16] %v377, 128
    %394 = vxpose.xlu0.b32.cont [3/16] %v378, 128
    %395 = vxpose.xlu0.b32.cont [4/16] %v379, 128
    %396 = vxpose.xlu0.b32.cont [5/16] %v380, 128
    %397 = vxpose.xlu0.b32.cont [6/16] %v381, 128
    %398 = vxpose.xlu0.b32.cont [7/16] %v382, 128
    %399 = vxpose.xlu0.b32.cont [8/16] %v383, 128
    %400 = vxpose.xlu0.b32.cont [9/16] %v384, 128
    %401 = vxpose.xlu0.b32.cont [10/16] %v385, 128
    %402 = vxpose.xlu0.b32.cont [11/16] %v386, 128
    %403 = vxpose.xlu0.b32.cont [12/16] %v387, 128
    %404 = vxpose.xlu0.b32.cont [13/16] %v388, 128
    %405 = vxpose.xlu0.b32.cont [14/16] %v389, 128
    %406 = vxpose.xlu0.b32.cont [15/16] %v390, 128
    %407 = vxpose.xlu0.b32.end [16/16] %v391, 128
    %v408 = vpop.trf.xlu0
    %v409 = vpop.trf.xlu0
    %v410 = vpop.trf.xlu0
    %v411 = vpop.trf.xlu0
    %v412 = vpop.trf.xlu0
    %v413 = vpop.trf.xlu0
    %v414 = vpop.trf.xlu0
    %v415 = vpop.trf.xlu0
    %v416 = vpop.trf.xlu0
    %v417 = vpop.trf.xlu0
    %v418 = vpop.trf.xlu0
    %v419 = vpop.trf.xlu0
    %v420 = vpop.trf.xlu0
    %v421 = vpop.trf.xlu0
    %v422 = vpop.trf.xlu0
    %v423 = vpop.trf.xlu0
    %424 = vst [vmem:[#allocation6] sm:$0xff] %v408
    %425 = vst [vmem:[#allocation6 + $0x8] sm:$0xff] %v409
    %426 = vst [vmem:[#allocation6 + $0x10] sm:$0xff] %v410
    %427 = vst [vmem:[#allocation6 + $0x18] sm:$0xff] %v411
    %428 = vst [vmem:[#allocation6 + $0x20] sm:$0xff] %v412
    %429 = vst [vmem:[#allocation6 + $0x28] sm:$0xff] %v413
    %430 = vst [vmem:[#allocation6 + $0x30] sm:$0xff] %v414
    %431 = vst [vmem:[#allocation6 + $0x38] sm:$0xff] %v415
    %432 = vst [vmem:[#allocation6 + $0x40] sm:$0xff] %v416
    %433 = vst [vmem:[#allocation6 + $0x48] sm:$0xff] %v417
    %434 = vst [vmem:[#allocation6 + $0x50] sm:$0xff] %v418
    %435 = vst [vmem:[#allocation6 + $0x58] sm:$0xff] %v419
    %436 = vst [vmem:[#allocation6 + $0x60] sm:$0xff] %v420
    %437 = vst [vmem:[#allocation6 + $0x68] sm:$0xff] %v421
    %438 = vst [vmem:[#allocation6 + $0x70] sm:$0xff] %v422
    %439 = vst [vmem:[#allocation6 + $0x78] sm:$0xff] %v423
    // Predicated region
    $region10: #{tpu_custom_call.1} parent=1 // pred_check
      _
    $region11: #{tpu_custom_call.1} parent=1 // pred_check_branch
      %441 = sbr.rel (0) target = $region13
    $region12: #{tpu_custom_call.1} parent=1 // pred_region
      %443 = vsyncadd [#allocation5], 1920
      %s444 = sshll.u32 [#allocation6], 4
      %s445 = int_to_ptr.vmem [resolvable:$true] %s444
      %s446 = sshll.u32 %s1, 4
      %s447 = int_to_ptr.hbm [resolvable:$true] %s446
      %452 = dma.vmem_to_hbm [thread:$0]  %s445, 128, %s447, [#allocation5], 128, 128, 8
    $region13: #{tpu_custom_call.1} parent=1 // pred_fallthru
      _
    // Predicated region
    $region14: #{tpu_custom_call.1} parent=1 // pred_check
      _
    $region15: #{tpu_custom_call.1} parent=1 // pred_check_branch
      %454 = sbr.rel (0) target = $region17
    $region16: #{tpu_custom_call.1} parent=1 // pred_region
      %456 = dma.done [#allocation5], 2048
    $region17: #{tpu_custom_call.1} parent=1 // pred_fallthru
      _
    %457 = vsyncpa [#allocation4], 1
    %458 = vsyncpa [#allocation5], 1

</llo_original>
